<compile_context>
chip_gen: v7x
topology: tpu7x:2x2x1
jax: 0.10.0
libtpu: 0.0.40
codegen_flags: <defaults>
</compile_context>

<pallas_src>
import functools

import jax
import jax.numpy as jnp
from jax.experimental import pallas as pl
from jax.experimental.pallas import tpu as pltpu


_MASK_VALUE = -1e30  # finite "-inf": exp() underflows to 0, never produces NaN


def _gat_block_kernel(d_ref, s_ref, h_src_ref, par_ref, adj_ref, o_ref,
                      m_sc, l_sc, acc_sc, *, negative_slope):
    """One (dest-row-tile, source-col-tile) step of the fused GAT block.

    d_ref:     [tm, 1]       f32   att_dst . h_i   (precomputed in wrapper)
    s_ref:     [1, tn]       f32   att_src . h_j   (precomputed in wrapper)
    h_src_ref: [tn, F_pad]   bf16/f32 projected source embeddings H_j
    par_ref:   [8, F_pad]    f32   row 0 = folded scale, row 1 = folded shift
    adj_ref:   [tm, tn]      int8  adjacency mask (dst, src), 1 = edge
    """
    j = pl.program_id(1)
    nj = pl.num_programs(1)

    # ---- init, once per destination row tile --------------------------------
    @pl.when(j == 0)
    def _():
        m_sc[...] = jnp.full(m_sc.shape, _MASK_VALUE, jnp.float32)
        l_sc[...] = jnp.zeros(l_sc.shape, jnp.float32)
        acc_sc[...] = jnp.zeros(acc_sc.shape, jnp.float32)

    # ---- attention logits for this tile (all f32 VPU math) ------------------
    e = d_ref[...] + s_ref[...]                               # [tm, tn]
    e = jnp.where(e > 0, e, negative_slope * e)               # LeakyReLU
    mask = adj_ref[...] != 0                                  # int8 predicate
    logits = jnp.where(mask, e, _MASK_VALUE)

    # ---- online (flash-style) masked softmax + aggregation ------------------
    # NOTE: fully-masked rows (padding / isolated nodes without self-loop)
    # degrade to a uniform softmax; padded rows are sliced off in the wrapper
    # and real nodes always carry a self-loop.
    m_prev = m_sc[...]
    m_new = jnp.maximum(m_prev, jnp.max(logits, axis=-1, keepdims=True))
    corr = jnp.exp(m_prev - m_new)
    p = jnp.exp(logits - m_new)                               # [tm, tn]
    l_sc[...] = corr * l_sc[...] + jnp.sum(p, axis=-1, keepdims=True)
    acc_sc[...] = corr * acc_sc[...] + jnp.dot(
        p.astype(h_src_ref.dtype), h_src_ref[...],
        preferred_element_type=jnp.float32)
    m_sc[...] = m_new

    # ---- finalize: normalize, bias+BN (folded), ReLU, eval-dropout (identity)
    @pl.when(j == nj - 1)
    def _():
        scale = par_ref[0:1, :]
        shift = par_ref[1:2, :]
        inv_l = pl.reciprocal(l_sc[...], approx=True)
        out = acc_sc[...] * inv_l
        out = out * scale + shift
        out = jnp.maximum(out, 0.0)
        o_ref[...] = out.astype(o_ref.dtype)


def _round_up(n, m):
    return (n + m - 1) // m * m


def gat_block(x, edge_index, params, *, do_bn=True, negative_slope=0.2,
              bn_eps=1e-5, mxu_dtype=jnp.bfloat16):
    """Fused GATConv -> BatchNorm1d(eval) -> ReLU -> Dropout(eval).

    x:          [N, F_in]  float
    edge_index: [2, E]     int32, row 0 = source, row 1 = target (PyG layout)
    """
    N, _ = x.shape
    f_out = params["w"].shape[1]
    f32 = jnp.float32

    fo_pad = _round_up(f_out, 128)        # lane-dense output / full MXU columns

    # ---- tile selection ------------------------------------------------------
    # Reduction (source) tile tn as big as reasonable; destination tile tm up
    # to 256 while keeping >= 2 i-tiles so the "parallel" axis can shard
    # across v7x's two TensorCores.
    n_pad = _round_up(N, 128)
    if n_pad >= 512:
        n_pad = _round_up(n_pad, 512)
        tn = 1024 if n_pad % 1024 == 0 else 512
    else:
        tn = n_pad
    tm = 256 if (n_pad % 256 == 0 and n_pad // 256 >= 2) else 128

    # ---- hoisted projection + attention terms (exact, f32) -------------------
    h = x.astype(f32) @ params["w"].astype(f32)                       # [N, F]
    d = h @ params["a_dst"].astype(f32)                               # [N]
    s = h @ params["a_src"].astype(f32)                               # [N]

    h_p = jnp.zeros((n_pad, fo_pad), mxu_dtype).at[:N, :f_out].set(
        h.astype(mxu_dtype))
    d_p = jnp.zeros((n_pad, 1), f32).at[:N, 0].set(d)
    s_p = jnp.zeros((1, n_pad), f32).at[0, :N].set(s)

    # Dense adjacency mask in int8: adj[dst, src] = 1, plus self-loops (PyG
    # GATConv default).  Padded rows/cols stay 0 == fully masked.
    src_i, dst_i = edge_index[0], edge_index[1]
    adj = jnp.zeros((n_pad, n_pad), jnp.int8)
    adj = adj.at[dst_i, src_i].set(1)
    idx = jnp.arange(N)
    adj = adj.at[idx, idx].set(1)

    # Fold GATConv bias + eval-mode BatchNorm1d into one per-feature
    # scale/shift, packed into a single operand (one DMA).
    bias = params["bias"].astype(f32)
    if do_bn:
        inv_std = 1.0 / jnp.sqrt(params["running_var"].astype(f32) + bn_eps)
        scale = params["gamma"].astype(f32) * inv_std
        shift = (params["beta"].astype(f32)
                 - params["running_mean"].astype(f32) * scale
                 + bias * scale)
    else:
        scale = jnp.ones((f_out,), f32)
        shift = bias
    packed = jnp.zeros((8, fo_pad), f32)
    packed = packed.at[0, :f_out].set(scale)
    packed = packed.at[1, :f_out].set(shift)

    kernel = functools.partial(_gat_block_kernel,
                               negative_slope=float(negative_slope))

    # If profiling shows the adj / H_src DMAs exposed, add
    # pipeline_mode=pl.Buffered(3) to those BlockSpecs.
    out_padded = pl.pallas_call(
        kernel,
        out_shape=jax.ShapeDtypeStruct((n_pad, fo_pad), f32),
        grid=(n_pad // tm, n_pad // tn),
        in_specs=[
            pl.BlockSpec((tm, 1), lambda i, j: (i, 0)),         # d (dest term)
            pl.BlockSpec((1, tn), lambda i, j: (0, j)),         # s (source term)
            pl.BlockSpec((tn, fo_pad), lambda i, j: (j, 0)),    # H_src tile
            pl.BlockSpec((8, fo_pad), lambda i, j: (0, 0)),     # packed params
            pl.BlockSpec((tm, tn), lambda i, j: (i, j)),        # adj tile (int8)
        ],
        out_specs=pl.BlockSpec((tm, fo_pad), lambda i, j: (i, 0)),
        scratch_shapes=[
            pltpu.VMEM((tm, 1), f32),       # running max
            pltpu.VMEM((tm, 1), f32),       # running sum
            pltpu.VMEM((tm, fo_pad), f32),  # output accumulator
        ],
        compiler_params=pltpu.CompilerParams(
            dimension_semantics=("parallel", "arbitrary"),
            vmem_limit_bytes=48 * 1024 * 1024),  # > defaults, < v7x 64 MiB
    )(d_p, s_p, h_p, packed, adj)

    return out_padded[:N, :f_out]


def make_params(key, in_features, out_features):
    k_w, k_a1, k_a2 = jax.random.split(key, 3)
    scale_w = 1.0 / jnp.sqrt(jnp.float32(in_features))
    scale_a = 1.0 / jnp.sqrt(jnp.float32(out_features))
    return {
        "w": jax.random.uniform(k_w, (in_features, out_features), jnp.float32,
                                -scale_w, scale_w),
        "a_src": jax.random.uniform(k_a1, (out_features,), jnp.float32,
                                    -scale_a, scale_a),
        "a_dst": jax.random.uniform(k_a2, (out_features,), jnp.float32,
                                    -scale_a, scale_a),
        "bias": jnp.zeros((out_features,), jnp.float32),
        "gamma": jnp.ones((out_features,), jnp.float32),          # BN weight
        "beta": jnp.zeros((out_features,), jnp.float32),          # BN bias
        "running_mean": jnp.zeros((out_features,), jnp.float32),  # BN eval stats
        "running_var": jnp.ones((out_features,), jnp.float32),
    }


def _reference(x, edge_index, params, *, do_bn, negative_slope, bn_eps):
    """Pure-JAX eval-mode reference (dense) for correctness checking."""
    N = x.shape[0]
    h = x @ params["w"]
    src, dst = edge_index[0], edge_index[1]
    adj = jnp.zeros((N, N), jnp.float32).at[dst, src].set(1.0)
    adj = adj.at[jnp.arange(N), jnp.arange(N)].set(1.0)
    d = h @ params["a_dst"]                      # destination term (h_i)
    s = h @ params["a_src"]                      # source term (h_j)
    e = d[:, None] + s[None, :]
    e = jnp.where(e > 0, e, negative_slope * e)
    logits = jnp.where(adj > 0, e, -1e30)
    alpha = jax.nn.softmax(logits, axis=-1)
    out = alpha @ h + params["bias"][None, :]
    if do_bn:
        inv_std = 1.0 / jnp.sqrt(params["running_var"] + bn_eps)
        out = ((out - params["running_mean"][None, :]) * inv_std[None, :]
               * params["gamma"][None, :] + params["beta"][None, :])
    return jnp.maximum(out, 0.0)


if __name__ == "__main__":
    key = jax.random.PRNGKey(0)
    k_x, k_e, k_p = jax.random.split(key, 3)

    N = 16            # number of graph nodes
    IN_FEATURES = 8
    OUT_FEATURES = 32
    E = 40            # number of directed edges

    x = jax.random.normal(k_x, (N, IN_FEATURES), jnp.float32)
    edge_index = jax.random.randint(k_e, (2, E), 0, N, jnp.int32)
    params = make_params(k_p, IN_FEATURES, OUT_FEATURES)

    out = gat_block(x, edge_index, params, do_bn=True)
    out = jax.block_until_ready(out)

    ref = _reference(x, edge_index, params, do_bn=True,
                     negative_slope=0.2, bn_eps=1e-5)

    assert out.shape == (N, OUT_FEATURES)
    assert bool(jnp.all(jnp.isfinite(out)))
    assert bool(jnp.all(out >= 0.0))               # post-ReLU
    assert bool(jnp.allclose(out, ref, rtol=1e-2, atol=1e-2)), \
        float(jnp.max(jnp.abs(out - ref)))
    print("KERNEL_OK")
</pallas_src>

<mosaic_0001>
module attributes {stable_mosaic.version = 11 : i64} {
  func.func @_gat_block_kernel(%arg0: i32, %arg1: i32, %arg2: memref<128x1xf32, #tpu.memory_space<vmem>>, %arg3: memref<1x128xf32, #tpu.memory_space<vmem>>, %arg4: memref<128x128xbf16, #tpu.memory_space<vmem>>, %arg5: memref<8x128xf32, #tpu.memory_space<vmem>>, %arg6: memref<128x128xi8, #tpu.memory_space<vmem>>, %arg7: memref<128x128xf32, #tpu.memory_space<vmem>>, %arg8: memref<128x1xf32, #tpu.memory_space<vmem>>, %arg9: memref<128x1xf32, #tpu.memory_space<vmem>>, %arg10: memref<128x128xf32, #tpu.memory_space<vmem>>) attributes {dimension_semantics = [#tpu.dimension_semantics<parallel>, #tpu.dimension_semantics<arbitrary>], iteration_bounds = array<i64: 1, 1>, scalar_prefetch = 0 : i64, scratch_operands = 3 : i64, tpu.core_type = #tpu.core_type<tc>, window_params = [{transform_indices = @transform_0, window_bounds = array<i64: 128, 1>}, {transform_indices = @transform_1, window_bounds = array<i64: 1, 128>}, {transform_indices = @transform_2, window_bounds = array<i64: 128, 128>}, {pipeline_mode = #tpu.pipeline_mode<synchronous>, transform_indices = @transform_3, window_bounds = array<i64: 8, 128>}, {transform_indices = @transform_4, window_bounds = array<i64: 128, 128>}, {transform_indices = @transform_5, window_bounds = array<i64: 128, 128>}]} {
    %c0_i32 = arith.constant 0 : i32
    %0 = arith.cmpi eq, %arg1, %c0_i32 : i32
    %1 = arith.extui %0 : i1 to i32
    %c0_i32_0 = arith.constant 0 : i32
    %2 = arith.cmpi ne, %1, %c0_i32_0 : i32
    scf.if %2 {
      %cst_27 = arith.constant -1.000000e+30 : f32
      %45 = vector.broadcast %cst_27 : f32 to vector<128x1xf32>
      %c0_28 = arith.constant 0 : index
      %c0_29 = arith.constant 0 : index
      %46 = vector.load %arg8[%c0_28, %c0_29] : memref<128x1xf32, #tpu.memory_space<vmem>>, vector<128x1xf32>
      tpu.vector_store %arg8[%c0_28, %c0_29], %45 {strides = array<i32>} : memref<128x1xf32, #tpu.memory_space<vmem>>, vector<128x1xf32>,
      %cst_30 = arith.constant 0.000000e+00 : f32
      %47 = vector.broadcast %cst_30 : f32 to vector<128x1xf32>
      %c0_31 = arith.constant 0 : index
      %c0_32 = arith.constant 0 : index
      %48 = vector.load %arg9[%c0_31, %c0_32] : memref<128x1xf32, #tpu.memory_space<vmem>>, vector<128x1xf32>
      tpu.vector_store %arg9[%c0_31, %c0_32], %47 {strides = array<i32>} : memref<128x1xf32, #tpu.memory_space<vmem>>, vector<128x1xf32>,
      %cst_33 = arith.constant 0.000000e+00 : f32
      %49 = vector.broadcast %cst_33 : f32 to vector<128x128xf32>
      %c0_34 = arith.constant 0 : index
      %c0_35 = arith.constant 0 : index
      %50 = vector.load %arg10[%c0_34, %c0_35] : memref<128x128xf32, #tpu.memory_space<vmem>>, vector<128x128xf32>
      tpu.vector_store %arg10[%c0_34, %c0_35], %49 {strides = array<i32>} : memref<128x128xf32, #tpu.memory_space<vmem>>, vector<128x128xf32>,
    } else {
    }
    %c0 = arith.constant 0 : index
    %c0_1 = arith.constant 0 : index
    %3 = vector.load %arg2[%c0, %c0_1] : memref<128x1xf32, #tpu.memory_space<vmem>>, vector<128x1xf32>
    %c0_2 = arith.constant 0 : index
    %c0_3 = arith.constant 0 : index
    %4 = vector.load %arg3[%c0_2, %c0_3] : memref<1x128xf32, #tpu.memory_space<vmem>>, vector<1x128xf32>
    %5 = vector.broadcast %3 : vector<128x1xf32> to vector<128x128xf32>
    %6 = vector.broadcast %4 : vector<1x128xf32> to vector<128x128xf32>
    %7 = arith.addf %5, %6 : vector<128x128xf32>
    %cst = arith.constant 0.000000e+00 : f32
    %8 = vector.broadcast %cst : f32 to vector<128x128xf32>
    %9 = arith.cmpf ogt, %7, %8 : vector<128x128xf32>
    %cst_4 = arith.constant 2.000000e-01 : f32
    %10 = vector.broadcast %cst_4 : f32 to vector<128x128xf32>
    %11 = arith.mulf %10, %7 : vector<128x128xf32>
    %12 = arith.select %9, %7, %11 : vector<128x128xi1>, vector<128x128xf32>
    %c0_5 = arith.constant 0 : index
    %c0_6 = arith.constant 0 : index
    %13 = vector.load %arg6[%c0_5, %c0_6] : memref<128x128xi8, #tpu.memory_space<vmem>>, vector<128x128xi8>
    %c0_i8 = arith.constant 0 : i8
    %14 = vector.broadcast %c0_i8 : i8 to vector<128x128xi8>
    %15 = arith.cmpi ne, %13, %14 : vector<128x128xi8>
    %cst_7 = arith.constant -1.000000e+30 : f32
    %16 = vector.broadcast %cst_7 : f32 to vector<128x128xf32>
    %17 = arith.select %15, %12, %16 : vector<128x128xi1>, vector<128x128xf32>
    %c0_8 = arith.constant 0 : index
    %c0_9 = arith.constant 0 : index
    %18 = vector.load %arg8[%c0_8, %c0_9] : memref<128x1xf32, #tpu.memory_space<vmem>>, vector<128x1xf32>
    %cst_10 = arith.constant dense<0xFF800000> : vector<128xf32>
    %19 = vector.multi_reduction <maximumf>, %17, %cst_10 [1] : vector<128x128xf32> to vector<128xf32>
    %20 = vector.shape_cast %19 : vector<128xf32> to vector<128x1xf32>
    %21 = arith.maximumf %18, %20 : vector<128x1xf32>
    %22 = arith.subf %18, %21 : vector<128x1xf32>
    %23 = math.exp %22 : vector<128x1xf32>
    %24 = vector.broadcast %21 : vector<128x1xf32> to vector<128x128xf32>
    %25 = arith.subf %17, %24 : vector<128x128xf32>
    %26 = math.exp %25 : vector<128x128xf32>
    %c0_11 = arith.constant 0 : index
    %c0_12 = arith.constant 0 : index
    %27 = vector.load %arg9[%c0_11, %c0_12] : memref<128x1xf32, #tpu.memory_space<vmem>>, vector<128x1xf32>
    %28 = arith.mulf %23, %27 : vector<128x1xf32>
    %cst_13 = arith.constant dense<0.000000e+00> : vector<128xf32>
    %29 = vector.multi_reduction <add>, %26, %cst_13 [1] : vector<128x128xf32> to vector<128xf32>
    %30 = vector.shape_cast %29 : vector<128xf32> to vector<128x1xf32>
    %31 = arith.addf %28, %30 : vector<128x1xf32>
    %c0_14 = arith.constant 0 : index
    %c0_15 = arith.constant 0 : index
    %32 = vector.load %arg9[%c0_14, %c0_15] : memref<128x1xf32, #tpu.memory_space<vmem>>, vector<128x1xf32>
    tpu.vector_store %arg9[%c0_14, %c0_15], %31 {strides = array<i32>} : memref<128x1xf32, #tpu.memory_space<vmem>>, vector<128x1xf32>,
    %c0_16 = arith.constant 0 : index
    %c0_17 = arith.constant 0 : index
    %33 = vector.load %arg10[%c0_16, %c0_17] : memref<128x128xf32, #tpu.memory_space<vmem>>, vector<128x128xf32>
    %34 = vector.broadcast %23 : vector<128x1xf32> to vector<128x128xf32>
    %35 = arith.mulf %34, %33 : vector<128x128xf32>
    %36 = arith.truncf %26 : vector<128x128xf32> to vector<128x128xbf16>
    %c0_18 = arith.constant 0 : index
    %c0_19 = arith.constant 0 : index
    %37 = vector.load %arg4[%c0_18, %c0_19] : memref<128x128xbf16, #tpu.memory_space<vmem>>, vector<128x128xbf16>
    %cst_20 = arith.constant dense<0.000000e+00> : vector<128x128xf32>
    %38 = tpu.matmul %36, %37, %cst_20 {dimension_numbers = #tpu.dot_dimension_numbers<[1], [0], [0], [1], [0, 0, 1, 1], [], []>} : vector<128x128xbf16>, vector<128x128xbf16>, vector<128x128xf32> -> vector<128x128xf32>
    %39 = arith.addf %35, %38 : vector<128x128xf32>
    %c0_21 = arith.constant 0 : index
    %c0_22 = arith.constant 0 : index
    %40 = vector.load %arg10[%c0_21, %c0_22] : memref<128x128xf32, #tpu.memory_space<vmem>>, vector<128x128xf32>
    tpu.vector_store %arg10[%c0_21, %c0_22], %39 {strides = array<i32>} : memref<128x128xf32, #tpu.memory_space<vmem>>, vector<128x128xf32>,
    %c0_23 = arith.constant 0 : index
    %c0_24 = arith.constant 0 : index
    %41 = vector.load %arg8[%c0_23, %c0_24] : memref<128x1xf32, #tpu.memory_space<vmem>>, vector<128x1xf32>
    tpu.vector_store %arg8[%c0_23, %c0_24], %21 {strides = array<i32>} : memref<128x1xf32, #tpu.memory_space<vmem>>, vector<128x1xf32>,
    %c0_i32_25 = arith.constant 0 : i32
    %42 = arith.cmpi eq, %arg1, %c0_i32_25 : i32
    %43 = arith.extui %42 : i1 to i32
    %c0_i32_26 = arith.constant 0 : i32
    %44 = arith.cmpi ne, %43, %c0_i32_26 : i32
    scf.if %44 {
      %c0_27 = arith.constant 0 : index
      %c0_28 = arith.constant 0 : index
      %45 = vector.load %arg5[%c0_27, %c0_28] : memref<8x128xf32, #tpu.memory_space<vmem>>, vector<1x128xf32>
      %c1 = arith.constant 1 : index
      %c0_29 = arith.constant 0 : index
      %46 = vector.load %arg5[%c1, %c0_29] : memref<8x128xf32, #tpu.memory_space<vmem>>, vector<1x128xf32>
      %c0_30 = arith.constant 0 : index
      %c0_31 = arith.constant 0 : index
      %47 = vector.load %arg9[%c0_30, %c0_31] : memref<128x1xf32, #tpu.memory_space<vmem>>, vector<128x1xf32>
      %48 = tpu.reciprocal %47 {approx = true} : vector<128x1xf32> -> vector<128x1xf32>
      %c0_32 = arith.constant 0 : index
      %c0_33 = arith.constant 0 : index
      %49 = vector.load %arg10[%c0_32, %c0_33] : memref<128x128xf32, #tpu.memory_space<vmem>>, vector<128x128xf32>
      %50 = vector.broadcast %48 : vector<128x1xf32> to vector<128x128xf32>
      %51 = arith.mulf %49, %50 : vector<128x128xf32>
      %52 = vector.broadcast %45 : vector<1x128xf32> to vector<128x128xf32>
      %53 = arith.mulf %51, %52 : vector<128x128xf32>
      %54 = vector.broadcast %46 : vector<1x128xf32> to vector<128x128xf32>
      %55 = arith.addf %53, %54 : vector<128x128xf32>
      %cst_34 = arith.constant 0.000000e+00 : f32
      %56 = vector.broadcast %cst_34 : f32 to vector<128x128xf32>
      %57 = arith.maximumf %55, %56 : vector<128x128xf32>
      %c0_35 = arith.constant 0 : index
      %c0_36 = arith.constant 0 : index
      %58 = vector.load %arg7[%c0_35, %c0_36] : memref<128x128xf32, #tpu.memory_space<vmem>>, vector<128x128xf32>
      tpu.vector_store %arg7[%c0_35, %c0_36], %57 {strides = array<i32>} : memref<128x128xf32, #tpu.memory_space<vmem>>, vector<128x128xf32>,
    } else {
    }
    return
  }
  func.func @transform_0(%arg0: i32, %arg1: i32) -> (i32, i32) {
    %c0_i32 = arith.constant 0 : i32
    %c0_i32_0 = arith.constant 0 : i32
    return %arg0, %c0_i32 : i32, i32
  }
  func.func @transform_1(%arg0: i32, %arg1: i32) -> (i32, i32) {
    %c0_i32 = arith.constant 0 : i32
    %c0_i32_0 = arith.constant 0 : i32
    return %c0_i32, %arg1 : i32, i32
  }
  func.func @transform_2(%arg0: i32, %arg1: i32) -> (i32, i32) {
    %c0_i32 = arith.constant 0 : i32
    %c0_i32_0 = arith.constant 0 : i32
    return %arg1, %c0_i32 : i32, i32
  }
  func.func @transform_3(%arg0: i32, %arg1: i32) -> (i32, i32) {
    %c0_i32 = arith.constant 0 : i32
    %c0_i32_0 = arith.constant 0 : i32
    %c0_i32_1 = arith.constant 0 : i32
    return %c0_i32, %c0_i32_0 : i32, i32
  }
  func.func @transform_4(%arg0: i32, %arg1: i32) -> (i32, i32) {
    %c0_i32 = arith.constant 0 : i32
    return %arg0, %arg1 : i32, i32
  }
  func.func @transform_5(%arg0: i32, %arg1: i32) -> (i32, i32) {
    %c0_i32 = arith.constant 0 : i32
    %c0_i32_0 = arith.constant 0 : i32
    return %arg0, %c0_i32 : i32, i32
  }
}

</mosaic_0001>

<llo_original>
// kernel: tpu_custom_call.1
$region0: #{tpu_custom_call.1}
  #allocation0 [shape = 'u32[]', space=smem, size = 0x4, offset = 0x4, fixed_abs, tag = 'smem constant byte address 0x4 - core index']
  #allocation1 [shape = 'u32[144,128]{1,0:T(1,128)}', space=vmem, size = 0x12000, scoped, tag = 'internal scratch']
  #allocation2 [shape = 'f32[128,1]{1,0:T(8,128)}', space=vmem, size = 0x10000, scoped, tag = 'scratch operand']
  #allocation3 [shape = 'f32[128,1]{1,0:T(8,128)}', space=vmem, size = 0x10000, scoped, tag = 'scratch operand']
  #allocation4 [shape = 'f32[128,128]{1,0:T(8,128)}', space=vmem, size = 0x10000, scoped, tag = 'scratch operand']
  %s0 = inlined_call_operand.vmem [shape: f32[128,1], index: 0, kind: input, shape index: {}]
  %s1 = inlined_call_operand.vmem [shape: f32[1,128], index: 1, kind: input, shape index: {}]
  %s2 = inlined_call_operand.vmem [shape: bf16[128,128], index: 2, kind: input, shape index: {}]
  %s3 = inlined_call_operand.vmem [shape: f32[8,128], index: 3, kind: input, shape index: {}]
  %s4 = inlined_call_operand.vmem [shape: s8[128,128], index: 4, kind: input, shape index: {}]
  %s5 = inlined_call_operand.hbm [shape: f32[128,128], index: 5, kind: output, shape index: {}]
  %s6 = sld [smem:[#allocation0]]
  $region38: #{tpu_custom_call.1} parent=0
    _
  %s8 = ssub.s32 1, %s6
  %s9 = scalar_select 0, %s8, %s6
  $region1: #{tpu_custom_call.1} parent=0
    #allocation5 [shape = 'u8[65536]{0}', space=vmem, size = 0x10000, scoped, tag = 'output window, operand 0, single buffered']
    #allocation6 [shape = 's32[1]{0}', space=sflag, size = 0x4, scoped, tag = 'scoped memory for tpu_custom_call.1']
    %10 = vsyncpa [#allocation6], 0
    // Predicated region
    $region2: #{tpu_custom_call.1} parent=1 // pred_check
      _
    $region3: #{tpu_custom_call.1} parent=1 // pred_check_branch
      %12 = sbr.rel (0) target = $region5
    $region4: #{tpu_custom_call.1} parent=1 // pred_region
      _
    $region5: #{tpu_custom_call.1} parent=1 // pred_fallthru
      _
    // Predicated region
    $region6: #{tpu_custom_call.1} parent=1 // pred_check
      _
    $region7: #{tpu_custom_call.1} parent=1 // pred_check_branch
      %14 = sbr.rel (0) target = $region9
    $region8: #{tpu_custom_call.1} parent=1 // pred_region
      _
    $region9: #{tpu_custom_call.1} parent=1 // pred_fallthru
      _
    // Predicated region
    $region10: #{tpu_custom_call.1} parent=1 // pred_check
      _
    $region11: #{tpu_custom_call.1} parent=1 // pred_check_branch
      %16 = sbr.rel (0) target = $region13
    $region12: #{tpu_custom_call.1} parent=1 // pred_region
      _
    $region13: #{tpu_custom_call.1} parent=1 // pred_fallthru
      _
    // Predicated region
    $region14: #{tpu_custom_call.1} parent=1 // pred_check
      _
    $region15: #{tpu_custom_call.1} parent=1 // pred_check_branch
      %18 = sbr.rel (0) target = $region17
    $region16: #{tpu_custom_call.1} parent=1 // pred_region
      _
    $region17: #{tpu_custom_call.1} parent=1 // pred_fallthru
      _
    // Predicated region
    $region18: #{tpu_custom_call.1} parent=1 // pred_check
      _
    $region19: #{tpu_custom_call.1} parent=1 // pred_check_branch
      %20 = sbr.rel (0) target = $region21
    $region20: #{tpu_custom_call.1} parent=1 // pred_region
      _
    $region21: #{tpu_custom_call.1} parent=1 // pred_fallthru
      _
    %p24 = scmp.eq.s32.totalorder 0, 0
    // Predicated region
    $region22: #{tpu_custom_call.1} parent=1 // pred_check
      %p25 = pneg %p24
    $region23: #{tpu_custom_call.1} parent=1 // pred_check_branch
      %27 = sbr.rel (%p25) target = $region25
    $region24: #{tpu_custom_call.1} parent=1 // pred_region
      %vm28 = vcmask 7168
      %29 = vst.msk [vmem:[#allocation2] sm:$0xff] %vm28, -1e+30
      %30 = vst.msk [vmem:[#allocation2 + $0x8] sm:$0xff] %vm28, -1e+30
      %31 = vst.msk [vmem:[#allocation2 + $0x10] sm:$0xff] %vm28, -1e+30
      %32 = vst.msk [vmem:[#allocation2 + $0x18] sm:$0xff] %vm28, -1e+30
      %33 = vst.msk [vmem:[#allocation2 + $0x20] sm:$0xff] %vm28, -1e+30
      %34 = vst.msk [vmem:[#allocation2 + $0x28] sm:$0xff] %vm28, -1e+30
      %35 = vst.msk [vmem:[#allocation2 + $0x30] sm:$0xff] %vm28, -1e+30
      %36 = vst.msk [vmem:[#allocation2 + $0x38] sm:$0xff] %vm28, -1e+30
      %37 = vst.msk [vmem:[#allocation2 + $0x40] sm:$0xff] %vm28, -1e+30
      %38 = vst.msk [vmem:[#allocation2 + $0x48] sm:$0xff] %vm28, -1e+30
      %39 = vst.msk [vmem:[#allocation2 + $0x50] sm:$0xff] %vm28, -1e+30
      %40 = vst.msk [vmem:[#allocation2 + $0x58] sm:$0xff] %vm28, -1e+30
      %41 = vst.msk [vmem:[#allocation2 + $0x60] sm:$0xff] %vm28, -1e+30
      %42 = vst.msk [vmem:[#allocation2 + $0x68] sm:$0xff] %vm28, -1e+30
      %43 = vst.msk [vmem:[#allocation2 + $0x70] sm:$0xff] %vm28, -1e+30
      %44 = vst.msk [vmem:[#allocation2 + $0x78] sm:$0xff] %vm28, -1e+30
      %45 = vst.msk [vmem:[#allocation3] sm:$0xff] %vm28, 0.0
      %46 = vst.msk [vmem:[#allocation3 + $0x8] sm:$0xff] %vm28, 0.0
      %47 = vst.msk [vmem:[#allocation3 + $0x10] sm:$0xff] %vm28, 0.0
      %48 = vst.msk [vmem:[#allocation3 + $0x18] sm:$0xff] %vm28, 0.0
      %49 = vst.msk [vmem:[#allocation3 + $0x20] sm:$0xff] %vm28, 0.0
      %50 = vst.msk [vmem:[#allocation3 + $0x28] sm:$0xff] %vm28, 0.0
      %51 = vst.msk [vmem:[#allocation3 + $0x30] sm:$0xff] %vm28, 0.0
      %52 = vst.msk [vmem:[#allocation3 + $0x38] sm:$0xff] %vm28, 0.0
      %53 = vst.msk [vmem:[#allocation3 + $0x40] sm:$0xff] %vm28, 0.0
      %54 = vst.msk [vmem:[#allocation3 + $0x48] sm:$0xff] %vm28, 0.0
      %55 = vst.msk [vmem:[#allocation3 + $0x50] sm:$0xff] %vm28, 0.0
      %56 = vst.msk [vmem:[#allocation3 + $0x58] sm:$0xff] %vm28, 0.0
      %57 = vst.msk [vmem:[#allocation3 + $0x60] sm:$0xff] %vm28, 0.0
      %58 = vst.msk [vmem:[#allocation3 + $0x68] sm:$0xff] %vm28, 0.0
      %59 = vst.msk [vmem:[#allocation3 + $0x70] sm:$0xff] %vm28, 0.0
      %60 = vst.msk [vmem:[#allocation3 + $0x78] sm:$0xff] %vm28, 0.0
      %61 = vst [vmem:[#allocation4] sm:$0xff] 0.0
      %62 = vst [vmem:[#allocation4 + $0x8] sm:$0xff] 0.0
      %63 = vst [vmem:[#allocation4 + $0x10] sm:$0xff] 0.0
      %64 = vst [vmem:[#allocation4 + $0x18] sm:$0xff] 0.0
      %65 = vst [vmem:[#allocation4 + $0x20] sm:$0xff] 0.0
      %66 = vst [vmem:[#allocation4 + $0x28] sm:$0xff] 0.0
      %67 = vst [vmem:[#allocation4 + $0x30] sm:$0xff] 0.0
      %68 = vst [vmem:[#allocation4 + $0x38] sm:$0xff] 0.0
      %69 = vst [vmem:[#allocation4 + $0x40] sm:$0xff] 0.0
      %70 = vst [vmem:[#allocation4 + $0x48] sm:$0xff] 0.0
      %71 = vst [vmem:[#allocation4 + $0x50] sm:$0xff] 0.0
      %72 = vst [vmem:[#allocation4 + $0x58] sm:$0xff] 0.0
      %73 = vst [vmem:[#allocation4 + $0x60] sm:$0xff] 0.0
      %74 = vst [vmem:[#allocation4 + $0x68] sm:$0xff] 0.0
      %75 = vst [vmem:[#allocation4 + $0x70] sm:$0xff] 0.0
      %76 = vst [vmem:[#allocation4 + $0x78] sm:$0xff] 0.0
    $region25: #{tpu_custom_call.1} parent=1 // pred_fallthru
      _
    %v77 = vld [vmem:[%s0] sm:$0xff]
    %v78 = vld [vmem:[%s0 + $0x8] sm:$0xff]
    %v79 = vld [vmem:[%s0 + $0x10] sm:$0xff]
    %v80 = vld [vmem:[%s0 + $0x18] sm:$0xff]
    %v81 = vld [vmem:[%s0 + $0x20] sm:$0xff]
    %v82 = vld [vmem:[%s0 + $0x28] sm:$0xff]
    %v83 = vld [vmem:[%s0 + $0x30] sm:$0xff]
    %v84 = vld [vmem:[%s0 + $0x38] sm:$0xff]
    %v85 = vld [vmem:[%s0 + $0x40] sm:$0xff]
    %v86 = vld [vmem:[%s0 + $0x48] sm:$0xff]
    %v87 = vld [vmem:[%s0 + $0x50] sm:$0xff]
    %v88 = vld [vmem:[%s0 + $0x58] sm:$0xff]
    %v89 = vld [vmem:[%s0 + $0x60] sm:$0xff]
    %v90 = vld [vmem:[%s0 + $0x68] sm:$0xff]
    %v91 = vld [vmem:[%s0 + $0x70] sm:$0xff]
    %v92 = vld [vmem:[%s0 + $0x78] sm:$0xff]
    %v93 = vld [vmem:[%s1] sm:$0x1]
    %95 = vset.pattern.permute.xlu0 0
    %96 = vperm.xlu0 %95, %v77
    %v97 = vpop.permute.xlu0 %96
    %100 = vset.pattern.permute.xlu0 0
    %101 = vperm.xlu0 %100, %v78
    %v102 = vpop.permute.xlu0 %101
    %105 = vset.pattern.permute.xlu0 0
    %106 = vperm.xlu0 %105, %v79
    %v107 = vpop.permute.xlu0 %106
    %110 = vset.pattern.permute.xlu0 0
    %111 = vperm.xlu0 %110, %v80
    %v112 = vpop.permute.xlu0 %111
    %115 = vset.pattern.permute.xlu0 0
    %116 = vperm.xlu0 %115, %v81
    %v117 = vpop.permute.xlu0 %116
    %120 = vset.pattern.permute.xlu0 0
    %121 = vperm.xlu0 %120, %v82
    %v122 = vpop.permute.xlu0 %121
    %125 = vset.pattern.permute.xlu0 0
    %126 = vperm.xlu0 %125, %v83
    %v127 = vpop.permute.xlu0 %126
    %130 = vset.pattern.permute.xlu0 0
    %131 = vperm.xlu0 %130, %v84
    %v132 = vpop.permute.xlu0 %131
    %135 = vset.pattern.permute.xlu0 0
    %136 = vperm.xlu0 %135, %v85
    %v137 = vpop.permute.xlu0 %136
    %140 = vset.pattern.permute.xlu0 0
    %141 = vperm.xlu0 %140, %v86
    %v142 = vpop.permute.xlu0 %141
    %145 = vset.pattern.permute.xlu0 0
    %146 = vperm.xlu0 %145, %v87
    %v147 = vpop.permute.xlu0 %146
    %150 = vset.pattern.permute.xlu0 0
    %151 = vperm.xlu0 %150, %v88
    %v152 = vpop.permute.xlu0 %151
    %155 = vset.pattern.permute.xlu0 0
    %156 = vperm.xlu0 %155, %v89
    %v157 = vpop.permute.xlu0 %156
    %160 = vset.pattern.permute.xlu0 0
    %161 = vperm.xlu0 %160, %v90
    %v162 = vpop.permute.xlu0 %161
    %165 = vset.pattern.permute.xlu0 0
    %166 = vperm.xlu0 %165, %v91
    %v167 = vpop.permute.xlu0 %166
    %170 = vset.pattern.permute.xlu0 0
    %171 = vperm.xlu0 %170, %v92
    %v172 = vpop.permute.xlu0 %171
    %v175 = vlaneseq
    %v176 = vshrl.u32 %v175, 7
    %v177 = vsub.s32 0, %v176
    %v178 = vrot.slane %v93, %v177
    %v180 = vadd.f32 %v97, %v178
    %v181 = vadd.f32 %v102, %v178
    %v182 = vadd.f32 %v107, %v178
    %v183 = vadd.f32 %v112, %v178
    %v184 = vadd.f32 %v117, %v178
    %v185 = vadd.f32 %v122, %v178
    %v186 = vadd.f32 %v127, %v178
    %v187 = vadd.f32 %v132, %v178
    %v188 = vadd.f32 %v137, %v178
    %v189 = vadd.f32 %v142, %v178
    %v190 = vadd.f32 %v147, %v178
    %v191 = vadd.f32 %v152, %v178
    %v192 = vadd.f32 %v157, %v178
    %v193 = vadd.f32 %v162, %v178
    %v194 = vadd.f32 %v167, %v178
    %v195 = vadd.f32 %v172, %v178
    %vm196 = vcmp.gt.f32.partialorder %v180, 0.0
    %vm197 = vcmp.gt.f32.partialorder %v181, 0.0
    %vm198 = vcmp.gt.f32.partialorder %v182, 0.0
    %vm199 = vcmp.gt.f32.partialorder %v183, 0.0
    %vm200 = vcmp.gt.f32.partialorder %v184, 0.0
    %vm201 = vcmp.gt.f32.partialorder %v185, 0.0
    %vm202 = vcmp.gt.f32.partialorder %v186, 0.0
    %vm203 = vcmp.gt.f32.partialorder %v187, 0.0
    %vm204 = vcmp.gt.f32.partialorder %v188, 0.0
    %vm205 = vcmp.gt.f32.partialorder %v189, 0.0
    %vm206 = vcmp.gt.f32.partialorder %v190, 0.0
    %vm207 = vcmp.gt.f32.partialorder %v191, 0.0
    %vm208 = vcmp.gt.f32.partialorder %v192, 0.0
    %vm209 = vcmp.gt.f32.partialorder %v193, 0.0
    %vm210 = vcmp.gt.f32.partialorder %v194, 0.0
    %vm211 = vcmp.gt.f32.partialorder %v195, 0.0
    %v212 = vmul.f32 %v180, 0.2
    %v213 = vmul.f32 %v181, 0.2
    %v214 = vmul.f32 %v182, 0.2
    %v215 = vmul.f32 %v183, 0.2
    %v216 = vmul.f32 %v184, 0.2
    %v217 = vmul.f32 %v185, 0.2
    %v218 = vmul.f32 %v186, 0.2
    %v219 = vmul.f32 %v187, 0.2
    %v220 = vmul.f32 %v188, 0.2
    %v221 = vmul.f32 %v189, 0.2
    %v222 = vmul.f32 %v190, 0.2
    %v223 = vmul.f32 %v191, 0.2
    %v224 = vmul.f32 %v192, 0.2
    %v225 = vmul.f32 %v193, 0.2
    %v226 = vmul.f32 %v194, 0.2
    %v227 = vmul.f32 %v195, 0.2
    %v228 = vsel %vm196, %v180, %v212
    %v229 = vsel %vm197, %v181, %v213
    %v230 = vsel %vm198, %v182, %v214
    %v231 = vsel %vm199, %v183, %v215
    %v232 = vsel %vm200, %v184, %v216
    %v233 = vsel %vm201, %v185, %v217
    %v234 = vsel %vm202, %v186, %v218
    %v235 = vsel %vm203, %v187, %v219
    %v236 = vsel %vm204, %v188, %v220
    %v237 = vsel %vm205, %v189, %v221
    %v238 = vsel %vm206, %v190, %v222
    %v239 = vsel %vm207, %v191, %v223
    %v240 = vsel %vm208, %v192, %v224
    %v241 = vsel %vm209, %v193, %v225
    %v242 = vsel %vm210, %v194, %v226
    %v243 = vsel %vm211, %v195, %v227
    %v244 = vld [vmem:[%s4] sm:$0xff]
    %v245 = vld [vmem:[%s4 + $0x8] sm:$0xff]
    %v246 = vld [vmem:[%s4 + $0x10] sm:$0xff]
    %v247 = vld [vmem:[%s4 + $0x18] sm:$0xff]
    %vm248 = vnez %v244
    %vm249 = vnez %v245
    %vm250 = vnez %v246
    %vm251 = vnez %v247
    %v252 = vsel %vm248, 16843009, 0
    %v253 = vsel %vm249, 16843009, 0
    %v254 = vsel %vm250, 16843009, 0
    %v255 = vsel %vm251, 16843009, 0
    %v256 = vunpack.c.0.s8 %v252
    %v257 = vunpack.c.1.s8 %v252
    %v258 = vunpack.c.2.s8 %v252
    %v259 = vunpack.c.3.s8 %v252
    %v260 = vunpack.c.0.s8 %v253
    %v261 = vunpack.c.1.s8 %v253
    %v262 = vunpack.c.2.s8 %v253
    %v263 = vunpack.c.3.s8 %v253
    %v264 = vunpack.c.0.s8 %v254
    %v265 = vunpack.c.1.s8 %v254
    %v266 = vunpack.c.2.s8 %v254
    %v267 = vunpack.c.3.s8 %v254
    %v268 = vunpack.c.0.s8 %v255
    %v269 = vunpack.c.1.s8 %v255
    %v270 = vunpack.c.2.s8 %v255
    %v271 = vunpack.c.3.s8 %v255
    %v272 = vpack.c.b16 %v256, %v256
    %v273 = vpack.c.b8 %v272, %v272
    %v274 = vpack.c.b16 %v257, %v257
    %v275 = vpack.c.b8 %v274, %v274
    %v276 = vpack.c.b16 %v258, %v258
    %v277 = vpack.c.b8 %v276, %v276
    %v278 = vpack.c.b16 %v259, %v259
    %v279 = vpack.c.b8 %v278, %v278
    %v280 = vpack.c.b16 %v260, %v260
    %v281 = vpack.c.b8 %v280, %v280
    %v282 = vpack.c.b16 %v261, %v261
    %v283 = vpack.c.b8 %v282, %v282
    %v284 = vpack.c.b16 %v262, %v262
    %v285 = vpack.c.b8 %v284, %v284
    %v286 = vpack.c.b16 %v263, %v263
    %v287 = vpack.c.b8 %v286, %v286
    %v288 = vpack.c.b16 %v264, %v264
    %v289 = vpack.c.b8 %v288, %v288
    %v290 = vpack.c.b16 %v265, %v265
    %v291 = vpack.c.b8 %v290, %v290
    %v292 = vpack.c.b16 %v266, %v266
    %v293 = vpack.c.b8 %v292, %v292
    %v294 = vpack.c.b16 %v267, %v267
    %v295 = vpack.c.b8 %v294, %v294
    %v296 = vpack.c.b16 %v268, %v268
    %v297 = vpack.c.b8 %v296, %v296
    %v298 = vpack.c.b16 %v269, %v269
    %v299 = vpack.c.b8 %v298, %v298
    %v300 = vpack.c.b16 %v270, %v270
    %v301 = vpack.c.b8 %v300, %v300
    %v302 = vpack.c.b16 %v271, %v271
    %v303 = vpack.c.b8 %v302, %v302
    %vm304 = vnez %v273
    %vm305 = vnez %v275
    %vm306 = vnez %v277
    %vm307 = vnez %v279
    %vm308 = vnez %v281
    %vm309 = vnez %v283
    %vm310 = vnez %v285
    %vm311 = vnez %v287
    %vm312 = vnez %v289
    %vm313 = vnez %v291
    %vm314 = vnez %v293
    %vm315 = vnez %v295
    %vm316 = vnez %v297
    %vm317 = vnez %v299
    %vm318 = vnez %v301
    %vm319 = vnez %v303
    %v320 = vsel %vm304, 16843009, 0
    %v321 = vsel %vm305, 16843009, 0
    %v322 = vsel %vm306, 16843009, 0
    %v323 = vsel %vm307, 16843009, 0
    %v324 = vsel %vm308, 16843009, 0
    %v325 = vsel %vm309, 16843009, 0
    %v326 = vsel %vm310, 16843009, 0
    %v327 = vsel %vm311, 16843009, 0
    %v328 = vsel %vm312, 16843009, 0
    %v329 = vsel %vm313, 16843009, 0
    %v330 = vsel %vm314, 16843009, 0
    %v331 = vsel %vm315, 16843009, 0
    %v332 = vsel %vm316, 16843009, 0
    %v333 = vsel %vm317, 16843009, 0
    %v334 = vsel %vm318, 16843009, 0
    %v335 = vsel %vm319, 16843009, 0
    %v336 = vunpack.c.0.s8 %v320
    %v337 = vunpack.c.0.s8 %v321
    %v338 = vunpack.c.0.s8 %v322
    %v339 = vunpack.c.0.s8 %v323
    %v340 = vunpack.c.0.s8 %v324
    %v341 = vunpack.c.0.s8 %v325
    %v342 = vunpack.c.0.s8 %v326
    %v343 = vunpack.c.0.s8 %v327
    %v344 = vunpack.c.0.s8 %v328
    %v345 = vunpack.c.0.s8 %v329
    %v346 = vunpack.c.0.s8 %v330
    %v347 = vunpack.c.0.s8 %v331
    %v348 = vunpack.c.0.s8 %v332
    %v349 = vunpack.c.0.s8 %v333
    %v350 = vunpack.c.0.s8 %v334
    %v351 = vunpack.c.0.s8 %v335
    %vm352 = vcmp.ne.s32.totalorder %v336, 0
    %vm353 = vcmp.ne.s32.totalorder %v337, 0
    %vm354 = vcmp.ne.s32.totalorder %v338, 0
    %vm355 = vcmp.ne.s32.totalorder %v339, 0
    %vm356 = vcmp.ne.s32.totalorder %v340, 0
    %vm357 = vcmp.ne.s32.totalorder %v341, 0
    %vm358 = vcmp.ne.s32.totalorder %v342, 0
    %vm359 = vcmp.ne.s32.totalorder %v343, 0
    %vm360 = vcmp.ne.s32.totalorder %v344, 0
    %vm361 = vcmp.ne.s32.totalorder %v345, 0
    %vm362 = vcmp.ne.s32.totalorder %v346, 0
    %vm363 = vcmp.ne.s32.totalorder %v347, 0
    %vm364 = vcmp.ne.s32.totalorder %v348, 0
    %vm365 = vcmp.ne.s32.totalorder %v349, 0
    %vm366 = vcmp.ne.s32.totalorder %v350, 0
    %vm367 = vcmp.ne.s32.totalorder %v351, 0
    %v368 = vsel %vm352, %v228, -1e+30
    %v369 = vsel %vm353, %v229, -1e+30
    %v370 = vsel %vm354, %v230, -1e+30
    %v371 = vsel %vm355, %v231, -1e+30
    %v372 = vsel %vm356, %v232, -1e+30
    %v373 = vsel %vm357, %v233, -1e+30
    %v374 = vsel %vm358, %v234, -1e+30
    %v375 = vsel %vm359, %v235, -1e+30
    %v376 = vsel %vm360, %v236, -1e+30
    %v377 = vsel %vm361, %v237, -1e+30
    %v378 = vsel %vm362, %v238, -1e+30
    %v379 = vsel %vm363, %v239, -1e+30
    %v380 = vsel %vm364, %v240, -1e+30
    %v381 = vsel %vm365, %v241, -1e+30
    %v382 = vsel %vm366, %v242, -1e+30
    %v383 = vsel %vm367, %v243, -1e+30
    %v384 = vld [vmem:[#allocation2] sm:$0xff]
    %v385 = vld [vmem:[#allocation2 + $0x8] sm:$0xff]
    %v386 = vld [vmem:[#allocation2 + $0x10] sm:$0xff]
    %v387 = vld [vmem:[#allocation2 + $0x18] sm:$0xff]
    %v388 = vld [vmem:[#allocation2 + $0x20] sm:$0xff]
    %v389 = vld [vmem:[#allocation2 + $0x28] sm:$0xff]
    %v390 = vld [vmem:[#allocation2 + $0x30] sm:$0xff]
    %v391 = vld [vmem:[#allocation2 + $0x38] sm:$0xff]
    %v392 = vld [vmem:[#allocation2 + $0x40] sm:$0xff]
    %v393 = vld [vmem:[#allocation2 + $0x48] sm:$0xff]
    %v394 = vld [vmem:[#allocation2 + $0x50] sm:$0xff]
    %v395 = vld [vmem:[#allocation2 + $0x58] sm:$0xff]
    %v396 = vld [vmem:[#allocation2 + $0x60] sm:$0xff]
    %v397 = vld [vmem:[#allocation2 + $0x68] sm:$0xff]
    %v398 = vld [vmem:[#allocation2 + $0x70] sm:$0xff]
    %v399 = vld [vmem:[#allocation2 + $0x78] sm:$0xff]
    %400 = vmax.xlane.f32.xlu0 %v368
    %v401 = vpop.xlane.xlu0 %400
    %402 = vmax.xlane.f32.xlu0 %v369
    %v403 = vpop.xlane.xlu0 %402
    %404 = vmax.xlane.f32.xlu0 %v370
    %v405 = vpop.xlane.xlu0 %404
    %406 = vmax.xlane.f32.xlu0 %v371
    %v407 = vpop.xlane.xlu0 %406
    %408 = vmax.xlane.f32.xlu0 %v372
    %v409 = vpop.xlane.xlu0 %408
    %410 = vmax.xlane.f32.xlu0 %v373
    %v411 = vpop.xlane.xlu0 %410
    %412 = vmax.xlane.f32.xlu0 %v374
    %v413 = vpop.xlane.xlu0 %412
    %414 = vmax.xlane.f32.xlu0 %v375
    %v415 = vpop.xlane.xlu0 %414
    %416 = vmax.xlane.f32.xlu0 %v376
    %v417 = vpop.xlane.xlu0 %416
    %418 = vmax.xlane.f32.xlu0 %v377
    %v419 = vpop.xlane.xlu0 %418
    %420 = vmax.xlane.f32.xlu0 %v378
    %v421 = vpop.xlane.xlu0 %420
    %422 = vmax.xlane.f32.xlu0 %v379
    %v423 = vpop.xlane.xlu0 %422
    %424 = vmax.xlane.f32.xlu0 %v380
    %v425 = vpop.xlane.xlu0 %424
    %426 = vmax.xlane.f32.xlu0 %v381
    %v427 = vpop.xlane.xlu0 %426
    %428 = vmax.xlane.f32.xlu0 %v382
    %v429 = vpop.xlane.xlu0 %428
    %430 = vmax.xlane.f32.xlu0 %v383
    %v431 = vpop.xlane.xlu0 %430
    %v432 = vmax.f32 %v384, %v401
    %v433 = vmax.f32 %v385, %v403
    %v434 = vmax.f32 %v386, %v405
    %v435 = vmax.f32 %v387, %v407
    %v436 = vmax.f32 %v388, %v409
    %v437 = vmax.f32 %v389, %v411
    %v438 = vmax.f32 %v390, %v413
    %v439 = vmax.f32 %v391, %v415
    %v440 = vmax.f32 %v392, %v417
    %v441 = vmax.f32 %v393, %v419
    %v442 = vmax.f32 %v394, %v421
    %v443 = vmax.f32 %v395, %v423
    %v444 = vmax.f32 %v396, %v425
    %v445 = vmax.f32 %v397, %v427
    %v446 = vmax.f32 %v398, %v429
    %v447 = vmax.f32 %v399, %v431
    %v448 = vsub.f32 %v384, %v432
    %v449 = vsub.f32 %v385, %v433
    %v450 = vsub.f32 %v386, %v434
    %v451 = vsub.f32 %v387, %v435
    %v452 = vsub.f32 %v388, %v436
    %v453 = vsub.f32 %v389, %v437
    %v454 = vsub.f32 %v390, %v438
    %v455 = vsub.f32 %v391, %v439
    %v456 = vsub.f32 %v392, %v440
    %v457 = vsub.f32 %v393, %v441
    %v458 = vsub.f32 %v394, %v442
    %v459 = vsub.f32 %v395, %v443
    %v460 = vsub.f32 %v396, %v444
    %v461 = vsub.f32 %v397, %v445
    %v462 = vsub.f32 %v398, %v446
    %v463 = vsub.f32 %v399, %v447
    %v464 = vmul.f32 %v448, 1.442695
    %v465 = vpow.pop %v464
    %v466 = vmul.f32 %v449, 1.442695
    %v467 = vpow.pop %v466
    %v468 = vmul.f32 %v450, 1.442695
    %v469 = vpow.pop %v468
    %v470 = vmul.f32 %v451, 1.442695
    %v471 = vpow.pop %v470
    %v472 = vmul.f32 %v452, 1.442695
    %v473 = vpow.pop %v472
    %v474 = vmul.f32 %v453, 1.442695
    %v475 = vpow.pop %v474
    %v476 = vmul.f32 %v454, 1.442695
    %v477 = vpow.pop %v476
    %v478 = vmul.f32 %v455, 1.442695
    %v479 = vpow.pop %v478
    %v480 = vmul.f32 %v456, 1.442695
    %v481 = vpow.pop %v480
    %v482 = vmul.f32 %v457, 1.442695
    %v483 = vpow.pop %v482
    %v484 = vmul.f32 %v458, 1.442695
    %v485 = vpow.pop %v484
    %v486 = vmul.f32 %v459, 1.442695
    %v487 = vpow.pop %v486
    %v488 = vmul.f32 %v460, 1.442695
    %v489 = vpow.pop %v488
    %v490 = vmul.f32 %v461, 1.442695
    %v491 = vpow.pop %v490
    %v492 = vmul.f32 %v462, 1.442695
    %v493 = vpow.pop %v492
    %v494 = vmul.f32 %v463, 1.442695
    %v495 = vpow.pop %v494
    %497 = vset.pattern.permute.xlu0 0
    %498 = vperm.xlu0 %497, %v432
    %v499 = vpop.permute.xlu0 %498
    %502 = vset.pattern.permute.xlu0 0
    %503 = vperm.xlu0 %502, %v433
    %v504 = vpop.permute.xlu0 %503
    %507 = vset.pattern.permute.xlu0 0
    %508 = vperm.xlu0 %507, %v434
    %v509 = vpop.permute.xlu0 %508
    %512 = vset.pattern.permute.xlu0 0
    %513 = vperm.xlu0 %512, %v435
    %v514 = vpop.permute.xlu0 %513
    %517 = vset.pattern.permute.xlu0 0
    %518 = vperm.xlu0 %517, %v436
    %v519 = vpop.permute.xlu0 %518
    %522 = vset.pattern.permute.xlu0 0
    %523 = vperm.xlu0 %522, %v437
    %v524 = vpop.permute.xlu0 %523
    %527 = vset.pattern.permute.xlu0 0
    %528 = vperm.xlu0 %527, %v438
    %v529 = vpop.permute.xlu0 %528
    %532 = vset.pattern.permute.xlu0 0
    %533 = vperm.xlu0 %532, %v439
    %v534 = vpop.permute.xlu0 %533
    %537 = vset.pattern.permute.xlu0 0
    %538 = vperm.xlu0 %537, %v440
    %v539 = vpop.permute.xlu0 %538
    %542 = vset.pattern.permute.xlu0 0
    %543 = vperm.xlu0 %542, %v441
    %v544 = vpop.permute.xlu0 %543
    %547 = vset.pattern.permute.xlu0 0
    %548 = vperm.xlu0 %547, %v442
    %v549 = vpop.permute.xlu0 %548
    %552 = vset.pattern.permute.xlu0 0
    %553 = vperm.xlu0 %552, %v443
    %v554 = vpop.permute.xlu0 %553
    %557 = vset.pattern.permute.xlu0 0
    %558 = vperm.xlu0 %557, %v444
    %v559 = vpop.permute.xlu0 %558
    %562 = vset.pattern.permute.xlu0 0
    %563 = vperm.xlu0 %562, %v445
    %v564 = vpop.permute.xlu0 %563
    %567 = vset.pattern.permute.xlu0 0
    %568 = vperm.xlu0 %567, %v446
    %v569 = vpop.permute.xlu0 %568
    %572 = vset.pattern.permute.xlu0 0
    %573 = vperm.xlu0 %572, %v447
    %v574 = vpop.permute.xlu0 %573
    %v576 = vsub.f32 %v368, %v499
    %v577 = vsub.f32 %v369, %v504
    %v578 = vsub.f32 %v370, %v509
    %v579 = vsub.f32 %v371, %v514
    %v580 = vsub.f32 %v372, %v519
    %v581 = vsub.f32 %v373, %v524
    %v582 = vsub.f32 %v374, %v529
    %v583 = vsub.f32 %v375, %v534
    %v584 = vsub.f32 %v376, %v539
    %v585 = vsub.f32 %v377, %v544
    %v586 = vsub.f32 %v378, %v549
    %v587 = vsub.f32 %v379, %v554
    %v588 = vsub.f32 %v380, %v559
    %v589 = vsub.f32 %v381, %v564
    %v590 = vsub.f32 %v382, %v569
    %v591 = vsub.f32 %v383, %v574
    %v592 = vmul.f32 %v576, 1.442695
    %v593 = vpow.pop %v592
    %v594 = vmul.f32 %v577, 1.442695
    %v595 = vpow.pop %v594
    %v596 = vmul.f32 %v578, 1.442695
    %v597 = vpow.pop %v596
    %v598 = vmul.f32 %v579, 1.442695
    %v599 = vpow.pop %v598
    %v600 = vmul.f32 %v580, 1.442695
    %v601 = vpow.pop %v600
    %v602 = vmul.f32 %v581, 1.442695
    %v603 = vpow.pop %v602
    %v604 = vmul.f32 %v582, 1.442695
    %v605 = vpow.pop %v604
    %v606 = vmul.f32 %v583, 1.442695
    %v607 = vpow.pop %v606
    %v608 = vmul.f32 %v584, 1.442695
    %v609 = vpow.pop %v608
    %v610 = vmul.f32 %v585, 1.442695
    %v611 = vpow.pop %v610
    %v612 = vmul.f32 %v586, 1.442695
    %v613 = vpow.pop %v612
    %v614 = vmul.f32 %v587, 1.442695
    %v615 = vpow.pop %v614
    %v616 = vmul.f32 %v588, 1.442695
    %v617 = vpow.pop %v616
    %v618 = vmul.f32 %v589, 1.442695
    %v619 = vpow.pop %v618
    %v620 = vmul.f32 %v590, 1.442695
    %v621 = vpow.pop %v620
    %v622 = vmul.f32 %v591, 1.442695
    %v623 = vpow.pop %v622
    %v624 = vld [vmem:[#allocation3] sm:$0xff]
    %v625 = vld [vmem:[#allocation3 + $0x8] sm:$0xff]
    %v626 = vld [vmem:[#allocation3 + $0x10] sm:$0xff]
    %v627 = vld [vmem:[#allocation3 + $0x18] sm:$0xff]
    %v628 = vld [vmem:[#allocation3 + $0x20] sm:$0xff]
    %v629 = vld [vmem:[#allocation3 + $0x28] sm:$0xff]
    %v630 = vld [vmem:[#allocation3 + $0x30] sm:$0xff]
    %v631 = vld [vmem:[#allocation3 + $0x38] sm:$0xff]
    %v632 = vld [vmem:[#allocation3 + $0x40] sm:$0xff]
    %v633 = vld [vmem:[#allocation3 + $0x48] sm:$0xff]
    %v634 = vld [vmem:[#allocation3 + $0x50] sm:$0xff]
    %v635 = vld [vmem:[#allocation3 + $0x58] sm:$0xff]
    %v636 = vld [vmem:[#allocation3 + $0x60] sm:$0xff]
    %v637 = vld [vmem:[#allocation3 + $0x68] sm:$0xff]
    %v638 = vld [vmem:[#allocation3 + $0x70] sm:$0xff]
    %v639 = vld [vmem:[#allocation3 + $0x78] sm:$0xff]
    %v640 = vmul.f32 %v465, %v624
    %v641 = vmul.f32 %v467, %v625
    %v642 = vmul.f32 %v469, %v626
    %v643 = vmul.f32 %v471, %v627
    %v644 = vmul.f32 %v473, %v628
    %v645 = vmul.f32 %v475, %v629
    %v646 = vmul.f32 %v477, %v630
    %v647 = vmul.f32 %v479, %v631
    %v648 = vmul.f32 %v481, %v632
    %v649 = vmul.f32 %v483, %v633
    %v650 = vmul.f32 %v485, %v634
    %v651 = vmul.f32 %v487, %v635
    %v652 = vmul.f32 %v489, %v636
    %v653 = vmul.f32 %v491, %v637
    %v654 = vmul.f32 %v493, %v638
    %v655 = vmul.f32 %v495, %v639
    %656 = vadd.xlane.f32.xlu0 %v593
    %v657 = vpop.xlane.xlu0 %656
    %658 = vadd.xlane.f32.xlu0 %v595
    %v659 = vpop.xlane.xlu0 %658
    %660 = vadd.xlane.f32.xlu0 %v597
    %v661 = vpop.xlane.xlu0 %660
    %662 = vadd.xlane.f32.xlu0 %v599
    %v663 = vpop.xlane.xlu0 %662
    %664 = vadd.xlane.f32.xlu0 %v601
    %v665 = vpop.xlane.xlu0 %664
    %666 = vadd.xlane.f32.xlu0 %v603
    %v667 = vpop.xlane.xlu0 %666
    %668 = vadd.xlane.f32.xlu0 %v605
    %v669 = vpop.xlane.xlu0 %668
    %670 = vadd.xlane.f32.xlu0 %v607
    %v671 = vpop.xlane.xlu0 %670
    %672 = vadd.xlane.f32.xlu0 %v609
    %v673 = vpop.xlane.xlu0 %672
    %674 = vadd.xlane.f32.xlu0 %v611
    %v675 = vpop.xlane.xlu0 %674
    %676 = vadd.xlane.f32.xlu0 %v613
    %v677 = vpop.xlane.xlu0 %676
    %678 = vadd.xlane.f32.xlu0 %v615
    %v679 = vpop.xlane.xlu0 %678
    %680 = vadd.xlane.f32.xlu0 %v617
    %v681 = vpop.xlane.xlu0 %680
    %682 = vadd.xlane.f32.xlu0 %v619
    %v683 = vpop.xlane.xlu0 %682
    %684 = vadd.xlane.f32.xlu0 %v621
    %v685 = vpop.xlane.xlu0 %684
    %686 = vadd.xlane.f32.xlu0 %v623
    %v687 = vpop.xlane.xlu0 %686
    %v688 = vadd.f32 %v640, %v657
    %v689 = vadd.f32 %v641, %v659
    %v690 = vadd.f32 %v642, %v661
    %v691 = vadd.f32 %v643, %v663
    %v692 = vadd.f32 %v644, %v665
    %v693 = vadd.f32 %v645, %v667
    %v694 = vadd.f32 %v646, %v669
    %v695 = vadd.f32 %v647, %v671
    %v696 = vadd.f32 %v648, %v673
    %v697 = vadd.f32 %v649, %v675
    %v698 = vadd.f32 %v650, %v677
    %v699 = vadd.f32 %v651, %v679
    %v700 = vadd.f32 %v652, %v681
    %v701 = vadd.f32 %v653, %v683
    %v702 = vadd.f32 %v654, %v685
    %v703 = vadd.f32 %v655, %v687
    %vm704 = vcmask 7168
    %705 = vst.msk [vmem:[#allocation3] sm:$0xff] %vm704, %v688
    %706 = vst.msk [vmem:[#allocation3 + $0x8] sm:$0xff] %vm704, %v689
    %707 = vst.msk [vmem:[#allocation3 + $0x10] sm:$0xff] %vm704, %v690
    %708 = vst.msk [vmem:[#allocation3 + $0x18] sm:$0xff] %vm704, %v691
    %709 = vst.msk [vmem:[#allocation3 + $0x20] sm:$0xff] %vm704, %v692
    %710 = vst.msk [vmem:[#allocation3 + $0x28] sm:$0xff] %vm704, %v693
    %711 = vst.msk [vmem:[#allocation3 + $0x30] sm:$0xff] %vm704, %v694
    %712 = vst.msk [vmem:[#allocation3 + $0x38] sm:$0xff] %vm704, %v695
    %713 = vst.msk [vmem:[#allocation3 + $0x40] sm:$0xff] %vm704, %v696
    %714 = vst.msk [vmem:[#allocation3 + $0x48] sm:$0xff] %vm704, %v697
    %715 = vst.msk [vmem:[#allocation3 + $0x50] sm:$0xff] %vm704, %v698
    %716 = vst.msk [vmem:[#allocation3 + $0x58] sm:$0xff] %vm704, %v699
    %717 = vst.msk [vmem:[#allocation3 + $0x60] sm:$0xff] %vm704, %v700
    %718 = vst.msk [vmem:[#allocation3 + $0x68] sm:$0xff] %vm704, %v701
    %719 = vst.msk [vmem:[#allocation3 + $0x70] sm:$0xff] %vm704, %v702
    %720 = vst.msk [vmem:[#allocation3 + $0x78] sm:$0xff] %vm704, %v703
    %v721 = vld [vmem:[#allocation4] sm:$0xff]
    %v722 = vld [vmem:[#allocation4 + $0x8] sm:$0xff]
    %v723 = vld [vmem:[#allocation4 + $0x10] sm:$0xff]
    %v724 = vld [vmem:[#allocation4 + $0x18] sm:$0xff]
    %v725 = vld [vmem:[#allocation4 + $0x20] sm:$0xff]
    %v726 = vld [vmem:[#allocation4 + $0x28] sm:$0xff]
    %v727 = vld [vmem:[#allocation4 + $0x30] sm:$0xff]
    %v728 = vld [vmem:[#allocation4 + $0x38] sm:$0xff]
    %v729 = vld [vmem:[#allocation4 + $0x40] sm:$0xff]
    %v730 = vld [vmem:[#allocation4 + $0x48] sm:$0xff]
    %v731 = vld [vmem:[#allocation4 + $0x50] sm:$0xff]
    %v732 = vld [vmem:[#allocation4 + $0x58] sm:$0xff]
    %v733 = vld [vmem:[#allocation4 + $0x60] sm:$0xff]
    %v734 = vld [vmem:[#allocation4 + $0x68] sm:$0xff]
    %v735 = vld [vmem:[#allocation4 + $0x70] sm:$0xff]
    %v736 = vld [vmem:[#allocation4 + $0x78] sm:$0xff]
    %738 = vset.pattern.permute.xlu0 0
    %739 = vperm.xlu0 %738, %v465
    %v740 = vpop.permute.xlu0 %739
    %743 = vset.pattern.permute.xlu0 0
    %744 = vperm.xlu0 %743, %v467
    %v745 = vpop.permute.xlu0 %744
    %748 = vset.pattern.permute.xlu0 0
    %749 = vperm.xlu0 %748, %v469
    %v750 = vpop.permute.xlu0 %749
    %753 = vset.pattern.permute.xlu0 0
    %754 = vperm.xlu0 %753, %v471
    %v755 = vpop.permute.xlu0 %754
    %758 = vset.pattern.permute.xlu0 0
    %759 = vperm.xlu0 %758, %v473
    %v760 = vpop.permute.xlu0 %759
    %763 = vset.pattern.permute.xlu0 0
    %764 = vperm.xlu0 %763, %v475
    %v765 = vpop.permute.xlu0 %764
    %768 = vset.pattern.permute.xlu0 0
    %769 = vperm.xlu0 %768, %v477
    %v770 = vpop.permute.xlu0 %769
    %773 = vset.pattern.permute.xlu0 0
    %774 = vperm.xlu0 %773, %v479
    %v775 = vpop.permute.xlu0 %774
    %778 = vset.pattern.permute.xlu0 0
    %779 = vperm.xlu0 %778, %v481
    %v780 = vpop.permute.xlu0 %779
    %783 = vset.pattern.permute.xlu0 0
    %784 = vperm.xlu0 %783, %v483
    %v785 = vpop.permute.xlu0 %784
    %788 = vset.pattern.permute.xlu0 0
    %789 = vperm.xlu0 %788, %v485
    %v790 = vpop.permute.xlu0 %789
    %793 = vset.pattern.permute.xlu0 0
    %794 = vperm.xlu0 %793, %v487
    %v795 = vpop.permute.xlu0 %794
    %798 = vset.pattern.permute.xlu0 0
    %799 = vperm.xlu0 %798, %v489
    %v800 = vpop.permute.xlu0 %799
    %803 = vset.pattern.permute.xlu0 0
    %804 = vperm.xlu0 %803, %v491
    %v805 = vpop.permute.xlu0 %804
    %808 = vset.pattern.permute.xlu0 0
    %809 = vperm.xlu0 %808, %v493
    %v810 = vpop.permute.xlu0 %809
    %813 = vset.pattern.permute.xlu0 0
    %814 = vperm.xlu0 %813, %v495
    %v815 = vpop.permute.xlu0 %814
    %v817 = vmul.f32 %v740, %v721
    %v818 = vmul.f32 %v745, %v722
    %v819 = vmul.f32 %v750, %v723
    %v820 = vmul.f32 %v755, %v724
    %v821 = vmul.f32 %v760, %v725
    %v822 = vmul.f32 %v765, %v726
    %v823 = vmul.f32 %v770, %v727
    %v824 = vmul.f32 %v775, %v728
    %v825 = vmul.f32 %v780, %v729
    %v826 = vmul.f32 %v785, %v730
    %v827 = vmul.f32 %v790, %v731
    %v828 = vmul.f32 %v795, %v732
    %v829 = vmul.f32 %v800, %v733
    %v830 = vmul.f32 %v805, %v734
    %v831 = vmul.f32 %v810, %v735
    %v832 = vmul.f32 %v815, %v736
    %v833 = vpack.c.bf16 %v595, %v593
    %v834 = vpack.c.bf16 %v599, %v597
    %v835 = vpack.c.bf16 %v603, %v601
    %v836 = vpack.c.bf16 %v607, %v605
    %v837 = vpack.c.bf16 %v611, %v609
    %v838 = vpack.c.bf16 %v615, %v613
    %v839 = vpack.c.bf16 %v619, %v617
    %v840 = vpack.c.bf16 %v623, %v621
    %v841 = vld [vmem:[%s2] sm:$0xf]
    %v842 = vld [vmem:[%s2 + $0x4] sm:$0xf]
    %v843 = vld [vmem:[%s2 + $0x8] sm:$0xf]
    %v844 = vld [vmem:[%s2 + $0xc] sm:$0xf]
    %v845 = vld [vmem:[%s2 + $0x10] sm:$0xf]
    %v846 = vld [vmem:[%s2 + $0x14] sm:$0xf]
    %v847 = vld [vmem:[%s2 + $0x18] sm:$0xf]
    %v848 = vld [vmem:[%s2 + $0x1c] sm:$0xf]
    %v849 = vld [vmem:[%s2 + $0x20] sm:$0xf]
    %v850 = vld [vmem:[%s2 + $0x24] sm:$0xf]
    %v851 = vld [vmem:[%s2 + $0x28] sm:$0xf]
    %v852 = vld [vmem:[%s2 + $0x2c] sm:$0xf]
    %v853 = vld [vmem:[%s2 + $0x30] sm:$0xf]
    %v854 = vld [vmem:[%s2 + $0x34] sm:$0xf]
    %v855 = vld [vmem:[%s2 + $0x38] sm:$0xf]
    %v856 = vld [vmem:[%s2 + $0x3c] sm:$0xf]
    %v873 = vunpack.c.l.b16 %v841
    %v874 = vunpack.c.l.b16 %v842
    %v875 = vunpack.c.l.b16 %v843
    %v876 = vunpack.c.l.b16 %v844
    %v877 = vunpack.c.l.b16 %v845
    %v878 = vunpack.c.l.b16 %v846
    %v879 = vunpack.c.l.b16 %v847
    %v880 = vunpack.c.l.b16 %v848
    %v881 = vunpack.c.l.b16 %v849
    %v882 = vunpack.c.l.b16 %v850
    %v883 = vunpack.c.l.b16 %v851
    %v884 = vunpack.c.l.b16 %v852
    %v885 = vunpack.c.l.b16 %v853
    %v886 = vunpack.c.l.b16 %v854
    %v887 = vunpack.c.l.b16 %v855
    %v888 = vunpack.c.l.b16 %v856
    %v889 = vpack.c.b16 %v874, %v873
    %v890 = vpack.c.b16 %v876, %v875
    %v891 = vpack.c.b16 %v878, %v877
    %v892 = vpack.c.b16 %v880, %v879
    %v893 = vpack.c.b16 %v882, %v881
    %v894 = vpack.c.b16 %v884, %v883
    %v895 = vpack.c.b16 %v886, %v885
    %v896 = vpack.c.b16 %v888, %v887
    %905 = vmatprep.subr.bf16.mxu0 0
    %906 = vmatpush1.bf16.msra.mxu0 %v889
    %907 = vmatprep.subr.bf16.mxu0 0
    %908 = vmatpush1.bf16.msra.mxu0 %v890
    %909 = vmatprep.subr.bf16.mxu0 0
    %910 = vmatpush1.bf16.msra.mxu0 %v891
    %911 = vmatprep.subr.bf16.mxu0 0
    %912 = vmatpush1.bf16.msra.mxu0 %v892
    %913 = vmatprep.subr.bf16.mxu0 0
    %914 = vmatpush1.bf16.msra.mxu0 %v893
    %915 = vmatprep.subr.bf16.mxu0 0
    %916 = vmatpush1.bf16.msra.mxu0 %v894
    %917 = vmatprep.subr.bf16.mxu0 0
    %918 = vmatpush1.bf16.msra.mxu0 %v895
    %919 = vmatprep.subr.bf16.mxu0 0
    %920 = vmatpush1.bf16.msra.mxu0 %v896
    %921 = vmatprep.subr.bf16.mxu0 0
    %922 = vmatpush1.bf16.msra.mxu0 0
    %923 = vmatprep.subr.bf16.mxu0 0
    %924 = vmatpush1.bf16.msra.mxu0 0
    %925 = vmatprep.subr.bf16.mxu0 0
    %926 = vmatpush1.bf16.msra.mxu0 0
    %927 = vmatprep.subr.bf16.mxu0 0
    %928 = vmatpush1.bf16.msra.mxu0 0
    %929 = vmatprep.subr.bf16.mxu0 0
    %930 = vmatpush1.bf16.msra.mxu0 0
    %931 = vmatprep.subr.bf16.mxu0 0
    %932 = vmatpush1.bf16.msra.mxu0 0
    %933 = vmatprep.subr.bf16.mxu0 0
    %934 = vmatpush1.bf16.msra.mxu0 0
    %935 = vmatprep.subr.bf16.mxu0 0
    %936 = vmatpush1.bf16.msra.mxu0 0
    %937 = vmatprep.mubr.bf16.mxu0 0
    %938 = vmatmul.mubr.bf16.gmra.mrb[0].mxu0 %v833
    %v939 = vpop.f32.mrb[0].mxu0
    %v940 = vadd.f32 0.0, %v939
    %v941 = vpop.f32.mrb[0].mxu0
    %v942 = vpop.f32.mrb[0].mxu0
    %v943 = vadd.f32 0.0, %v942
    %v944 = vpop.f32.mrb[0].mxu0
    %945 = vmatprep.mubr.bf16.mxu0 0
    %946 = vmatmul.mubr.bf16.gmra.mrb[0].mxu0 %v834
    %v947 = vpop.f32.mrb[0].mxu0
    %v948 = vadd.f32 0.0, %v947
    %v949 = vpop.f32.mrb[0].mxu0
    %v950 = vpop.f32.mrb[0].mxu0
    %v951 = vadd.f32 0.0, %v950
    %v952 = vpop.f32.mrb[0].mxu0
    %953 = vmatprep.mubr.bf16.mxu0 0
    %954 = vmatmul.mubr.bf16.gmra.mrb[0].mxu0 %v835
    %v955 = vpop.f32.mrb[0].mxu0
    %v956 = vadd.f32 0.0, %v955
    %v957 = vpop.f32.mrb[0].mxu0
    %v958 = vpop.f32.mrb[0].mxu0
    %v959 = vadd.f32 0.0, %v958
    %v960 = vpop.f32.mrb[0].mxu0
    %961 = vmatprep.mubr.bf16.mxu0 0
    %962 = vmatmul.mubr.bf16.gmra.mrb[0].mxu0 %v836
    %v963 = vpop.f32.mrb[0].mxu0
    %v964 = vadd.f32 0.0, %v963
    %v965 = vpop.f32.mrb[0].mxu0
    %v966 = vpop.f32.mrb[0].mxu0
    %v967 = vadd.f32 0.0, %v966
    %v968 = vpop.f32.mrb[0].mxu0
    %969 = vmatprep.mubr.bf16.mxu0 0
    %970 = vmatmul.mubr.bf16.gmra.mrb[0].mxu0 %v837
    %v971 = vpop.f32.mrb[0].mxu0
    %v972 = vadd.f32 0.0, %v971
    %v973 = vpop.f32.mrb[0].mxu0
    %v974 = vpop.f32.mrb[0].mxu0
    %v975 = vadd.f32 0.0, %v974
    %v976 = vpop.f32.mrb[0].mxu0
    %977 = vmatprep.mubr.bf16.mxu0 0
    %978 = vmatmul.mubr.bf16.gmra.mrb[0].mxu0 %v838
    %v979 = vpop.f32.mrb[0].mxu0
    %v980 = vadd.f32 0.0, %v979
    %v981 = vpop.f32.mrb[0].mxu0
    %v982 = vpop.f32.mrb[0].mxu0
    %v983 = vadd.f32 0.0, %v982
    %v984 = vpop.f32.mrb[0].mxu0
    %985 = vmatprep.mubr.bf16.mxu0 0
    %986 = vmatmul.mubr.bf16.gmra.mrb[0].mxu0 %v839
    %v987 = vpop.f32.mrb[0].mxu0
    %v988 = vadd.f32 0.0, %v987
    %v989 = vpop.f32.mrb[0].mxu0
    %v990 = vpop.f32.mrb[0].mxu0
    %v991 = vadd.f32 0.0, %v990
    %v992 = vpop.f32.mrb[0].mxu0
    %993 = vmatprep.mubr.bf16.mxu0 0
    %994 = vmatmul.mubr.bf16.gmra.mrb[0].mxu0 %v840
    %v995 = vpop.f32.mrb[0].mxu0
    %v996 = vadd.f32 0.0, %v995
    %v997 = vpop.f32.mrb[0].mxu0
    %v998 = vpop.f32.mrb[0].mxu0
    %v999 = vadd.f32 0.0, %v998
    %v1000 = vpop.f32.mrb[0].mxu0
    %1001 = vdwg.mxu0
    %v1002 = vadd.f32 %v817, %v940
    %v1003 = vadd.f32 %v818, %v943
    %v1004 = vadd.f32 %v819, %v948
    %v1005 = vadd.f32 %v820, %v951
    %v1006 = vadd.f32 %v821, %v956
    %v1007 = vadd.f32 %v822, %v959
    %v1008 = vadd.f32 %v823, %v964
    %v1009 = vadd.f32 %v824, %v967
    %v1010 = vadd.f32 %v825, %v972
    %v1011 = vadd.f32 %v826, %v975
    %v1012 = vadd.f32 %v827, %v980
    %v1013 = vadd.f32 %v828, %v983
    %v1014 = vadd.f32 %v829, %v988
    %v1015 = vadd.f32 %v830, %v991
    %v1016 = vadd.f32 %v831, %v996
    %v1017 = vadd.f32 %v832, %v999
    %1018 = vst [vmem:[#allocation4] sm:$0xff] %v1002
    %1019 = vst [vmem:[#allocation4 + $0x8] sm:$0xff] %v1003
    %1020 = vst [vmem:[#allocation4 + $0x10] sm:$0xff] %v1004
    %1021 = vst [vmem:[#allocation4 + $0x18] sm:$0xff] %v1005
    %1022 = vst [vmem:[#allocation4 + $0x20] sm:$0xff] %v1006
    %1023 = vst [vmem:[#allocation4 + $0x28] sm:$0xff] %v1007
    %1024 = vst [vmem:[#allocation4 + $0x30] sm:$0xff] %v1008
    %1025 = vst [vmem:[#allocation4 + $0x38] sm:$0xff] %v1009
    %1026 = vst [vmem:[#allocation4 + $0x40] sm:$0xff] %v1010
    %1027 = vst [vmem:[#allocation4 + $0x48] sm:$0xff] %v1011
    %1028 = vst [vmem:[#allocation4 + $0x50] sm:$0xff] %v1012
    %1029 = vst [vmem:[#allocation4 + $0x58] sm:$0xff] %v1013
    %1030 = vst [vmem:[#allocation4 + $0x60] sm:$0xff] %v1014
    %1031 = vst [vmem:[#allocation4 + $0x68] sm:$0xff] %v1015
    %1032 = vst [vmem:[#allocation4 + $0x70] sm:$0xff] %v1016
    %1033 = vst [vmem:[#allocation4 + $0x78] sm:$0xff] %v1017
    %1034 = vst.msk [vmem:[#allocation2] sm:$0xff] %vm704, %v432
    %1035 = vst.msk [vmem:[#allocation2 + $0x8] sm:$0xff] %vm704, %v433
    %1036 = vst.msk [vmem:[#allocation2 + $0x10] sm:$0xff] %vm704, %v434
    %1037 = vst.msk [vmem:[#allocation2 + $0x18] sm:$0xff] %vm704, %v435
    %1038 = vst.msk [vmem:[#allocation2 + $0x20] sm:$0xff] %vm704, %v436
    %1039 = vst.msk [vmem:[#allocation2 + $0x28] sm:$0xff] %vm704, %v437
    %1040 = vst.msk [vmem:[#allocation2 + $0x30] sm:$0xff] %vm704, %v438
    %1041 = vst.msk [vmem:[#allocation2 + $0x38] sm:$0xff] %vm704, %v439
    %1042 = vst.msk [vmem:[#allocation2 + $0x40] sm:$0xff] %vm704, %v440
    %1043 = vst.msk [vmem:[#allocation2 + $0x48] sm:$0xff] %vm704, %v441
    %1044 = vst.msk [vmem:[#allocation2 + $0x50] sm:$0xff] %vm704, %v442
    %1045 = vst.msk [vmem:[#allocation2 + $0x58] sm:$0xff] %vm704, %v443
    %1046 = vst.msk [vmem:[#allocation2 + $0x60] sm:$0xff] %vm704, %v444
    %1047 = vst.msk [vmem:[#allocation2 + $0x68] sm:$0xff] %vm704, %v445
    %1048 = vst.msk [vmem:[#allocation2 + $0x70] sm:$0xff] %vm704, %v446
    %1049 = vst.msk [vmem:[#allocation2 + $0x78] sm:$0xff] %vm704, %v447
    // Predicated region
    $region26: #{tpu_custom_call.1} parent=1 // pred_check
      %p1050 = pneg %p24
    $region27: #{tpu_custom_call.1} parent=1 // pred_check_branch
      %1052 = sbr.rel (%p1050) target = $region29
    $region28: #{tpu_custom_call.1} parent=1 // pred_region
      %v1053 = vld [vmem:[%s3] sm:$0x1]
      %v1054 = vld [vmem:[%s3 + $0x1] sm:$0x1]
      %v1055 = vld [vmem:[#allocation3] sm:$0xff]
      %v1056 = vld [vmem:[#allocation3 + $0x8] sm:$0xff]
      %v1057 = vld [vmem:[#allocation3 + $0x10] sm:$0xff]
      %v1058 = vld [vmem:[#allocation3 + $0x18] sm:$0xff]
      %v1059 = vld [vmem:[#allocation3 + $0x20] sm:$0xff]
      %v1060 = vld [vmem:[#allocation3 + $0x28] sm:$0xff]
      %v1061 = vld [vmem:[#allocation3 + $0x30] sm:$0xff]
      %v1062 = vld [vmem:[#allocation3 + $0x38] sm:$0xff]
      %v1063 = vld [vmem:[#allocation3 + $0x40] sm:$0xff]
      %v1064 = vld [vmem:[#allocation3 + $0x48] sm:$0xff]
      %v1065 = vld [vmem:[#allocation3 + $0x50] sm:$0xff]
      %v1066 = vld [vmem:[#allocation3 + $0x58] sm:$0xff]
      %v1067 = vld [vmem:[#allocation3 + $0x60] sm:$0xff]
      %v1068 = vld [vmem:[#allocation3 + $0x68] sm:$0xff]
      %v1069 = vld [vmem:[#allocation3 + $0x70] sm:$0xff]
      %v1070 = vld [vmem:[#allocation3 + $0x78] sm:$0xff]
      %v1071 = vrcp.pop %v1055
      %v1072 = vrcp.pop %v1056
      %v1073 = vrcp.pop %v1057
      %v1074 = vrcp.pop %v1058
      %v1075 = vrcp.pop %v1059
      %v1076 = vrcp.pop %v1060
      %v1077 = vrcp.pop %v1061
      %v1078 = vrcp.pop %v1062
      %v1079 = vrcp.pop %v1063
      %v1080 = vrcp.pop %v1064
      %v1081 = vrcp.pop %v1065
      %v1082 = vrcp.pop %v1066
      %v1083 = vrcp.pop %v1067
      %v1084 = vrcp.pop %v1068
      %v1085 = vrcp.pop %v1069
      %v1086 = vrcp.pop %v1070
      %v1087 = vld [vmem:[#allocation4] sm:$0xff]
      %v1088 = vld [vmem:[#allocation4 + $0x8] sm:$0xff]
      %v1089 = vld [vmem:[#allocation4 + $0x10] sm:$0xff]
      %v1090 = vld [vmem:[#allocation4 + $0x18] sm:$0xff]
      %v1091 = vld [vmem:[#allocation4 + $0x20] sm:$0xff]
      %v1092 = vld [vmem:[#allocation4 + $0x28] sm:$0xff]
      %v1093 = vld [vmem:[#allocation4 + $0x30] sm:$0xff]
      %v1094 = vld [vmem:[#allocation4 + $0x38] sm:$0xff]
      %v1095 = vld [vmem:[#allocation4 + $0x40] sm:$0xff]
      %v1096 = vld [vmem:[#allocation4 + $0x48] sm:$0xff]
      %v1097 = vld [vmem:[#allocation4 + $0x50] sm:$0xff]
      %v1098 = vld [vmem:[#allocation4 + $0x58] sm:$0xff]
      %v1099 = vld [vmem:[#allocation4 + $0x60] sm:$0xff]
      %v1100 = vld [vmem:[#allocation4 + $0x68] sm:$0xff]
      %v1101 = vld [vmem:[#allocation4 + $0x70] sm:$0xff]
      %v1102 = vld [vmem:[#allocation4 + $0x78] sm:$0xff]
      %1104 = vset.pattern.permute.xlu0 0
      %1105 = vperm.xlu0 %1104, %v1071
      %v1106 = vpop.permute.xlu0 %1105
      %1109 = vset.pattern.permute.xlu0 0
      %1110 = vperm.xlu0 %1109, %v1072
      %v1111 = vpop.permute.xlu0 %1110
      %1114 = vset.pattern.permute.xlu0 0
      %1115 = vperm.xlu0 %1114, %v1073
      %v1116 = vpop.permute.xlu0 %1115
      %1119 = vset.pattern.permute.xlu0 0
      %1120 = vperm.xlu0 %1119, %v1074
      %v1121 = vpop.permute.xlu0 %1120
      %1124 = vset.pattern.permute.xlu0 0
      %1125 = vperm.xlu0 %1124, %v1075
      %v1126 = vpop.permute.xlu0 %1125
      %1129 = vset.pattern.permute.xlu0 0
      %1130 = vperm.xlu0 %1129, %v1076
      %v1131 = vpop.permute.xlu0 %1130
      %1134 = vset.pattern.permute.xlu0 0
      %1135 = vperm.xlu0 %1134, %v1077
      %v1136 = vpop.permute.xlu0 %1135
      %1139 = vset.pattern.permute.xlu0 0
      %1140 = vperm.xlu0 %1139, %v1078
      %v1141 = vpop.permute.xlu0 %1140
      %1144 = vset.pattern.permute.xlu0 0
      %1145 = vperm.xlu0 %1144, %v1079
      %v1146 = vpop.permute.xlu0 %1145
      %1149 = vset.pattern.permute.xlu0 0
      %1150 = vperm.xlu0 %1149, %v1080
      %v1151 = vpop.permute.xlu0 %1150
      %1154 = vset.pattern.permute.xlu0 0
      %1155 = vperm.xlu0 %1154, %v1081
      %v1156 = vpop.permute.xlu0 %1155
      %1159 = vset.pattern.permute.xlu0 0
      %1160 = vperm.xlu0 %1159, %v1082
      %v1161 = vpop.permute.xlu0 %1160
      %1164 = vset.pattern.permute.xlu0 0
      %1165 = vperm.xlu0 %1164, %v1083
      %v1166 = vpop.permute.xlu0 %1165
      %1169 = vset.pattern.permute.xlu0 0
      %1170 = vperm.xlu0 %1169, %v1084
      %v1171 = vpop.permute.xlu0 %1170
      %1174 = vset.pattern.permute.xlu0 0
      %1175 = vperm.xlu0 %1174, %v1085
      %v1176 = vpop.permute.xlu0 %1175
      %1179 = vset.pattern.permute.xlu0 0
      %1180 = vperm.xlu0 %1179, %v1086
      %v1181 = vpop.permute.xlu0 %1180
      %v1183 = vmul.f32 %v1087, %v1106
      %v1184 = vmul.f32 %v1088, %v1111
      %v1185 = vmul.f32 %v1089, %v1116
      %v1186 = vmul.f32 %v1090, %v1121
      %v1187 = vmul.f32 %v1091, %v1126
      %v1188 = vmul.f32 %v1092, %v1131
      %v1189 = vmul.f32 %v1093, %v1136
      %v1190 = vmul.f32 %v1094, %v1141
      %v1191 = vmul.f32 %v1095, %v1146
      %v1192 = vmul.f32 %v1096, %v1151
      %v1193 = vmul.f32 %v1097, %v1156
      %v1194 = vmul.f32 %v1098, %v1161
      %v1195 = vmul.f32 %v1099, %v1166
      %v1196 = vmul.f32 %v1100, %v1171
      %v1197 = vmul.f32 %v1101, %v1176
      %v1198 = vmul.f32 %v1102, %v1181
      %v1199 = vlaneseq
      %v1200 = vshrl.u32 %v1199, 7
      %v1201 = vsub.s32 0, %v1200
      %v1202 = vrot.slane %v1053, %v1201
      %v1203 = vmul.f32 %v1183, %v1202
      %v1204 = vmul.f32 %v1184, %v1202
      %v1205 = vmul.f32 %v1185, %v1202
      %v1206 = vmul.f32 %v1186, %v1202
      %v1207 = vmul.f32 %v1187, %v1202
      %v1208 = vmul.f32 %v1188, %v1202
      %v1209 = vmul.f32 %v1189, %v1202
      %v1210 = vmul.f32 %v1190, %v1202
      %v1211 = vmul.f32 %v1191, %v1202
      %v1212 = vmul.f32 %v1192, %v1202
      %v1213 = vmul.f32 %v1193, %v1202
      %v1214 = vmul.f32 %v1194, %v1202
      %v1215 = vmul.f32 %v1195, %v1202
      %v1216 = vmul.f32 %v1196, %v1202
      %v1217 = vmul.f32 %v1197, %v1202
      %v1218 = vmul.f32 %v1198, %v1202
      %v1219 = vlaneseq
      %v1220 = vshrl.u32 %v1219, 7
      %v1221 = vsub.s32 0, %v1220
      %v1222 = vrot.slane %v1054, %v1221
      %v1223 = vadd.f32 %v1203, %v1222
      %v1224 = vadd.f32 %v1204, %v1222
      %v1225 = vadd.f32 %v1205, %v1222
      %v1226 = vadd.f32 %v1206, %v1222
      %v1227 = vadd.f32 %v1207, %v1222
      %v1228 = vadd.f32 %v1208, %v1222
      %v1229 = vadd.f32 %v1209, %v1222
      %v1230 = vadd.f32 %v1210, %v1222
      %v1231 = vadd.f32 %v1211, %v1222
      %v1232 = vadd.f32 %v1212, %v1222
      %v1233 = vadd.f32 %v1213, %v1222
      %v1234 = vadd.f32 %v1214, %v1222
      %v1235 = vadd.f32 %v1215, %v1222
      %v1236 = vadd.f32 %v1216, %v1222
      %v1237 = vadd.f32 %v1217, %v1222
      %v1238 = vadd.f32 %v1218, %v1222
      %v1239 = vmax.f32 %v1223, 0.0
      %v1240 = vmax.f32 %v1224, 0.0
      %v1241 = vmax.f32 %v1225, 0.0
      %v1242 = vmax.f32 %v1226, 0.0
      %v1243 = vmax.f32 %v1227, 0.0
      %v1244 = vmax.f32 %v1228, 0.0
      %v1245 = vmax.f32 %v1229, 0.0
      %v1246 = vmax.f32 %v1230, 0.0
      %v1247 = vmax.f32 %v1231, 0.0
      %v1248 = vmax.f32 %v1232, 0.0
      %v1249 = vmax.f32 %v1233, 0.0
      %v1250 = vmax.f32 %v1234, 0.0
      %v1251 = vmax.f32 %v1235, 0.0
      %v1252 = vmax.f32 %v1236, 0.0
      %v1253 = vmax.f32 %v1237, 0.0
      %v1254 = vmax.f32 %v1238, 0.0
      %1255 = vst [vmem:[#allocation5] sm:$0xff] %v1239
      %1256 = vst [vmem:[#allocation5 + $0x8] sm:$0xff] %v1240
      %1257 = vst [vmem:[#allocation5 + $0x10] sm:$0xff] %v1241
      %1258 = vst [vmem:[#allocation5 + $0x18] sm:$0xff] %v1242
      %1259 = vst [vmem:[#allocation5 + $0x20] sm:$0xff] %v1243
      %1260 = vst [vmem:[#allocation5 + $0x28] sm:$0xff] %v1244
      %1261 = vst [vmem:[#allocation5 + $0x30] sm:$0xff] %v1245
      %1262 = vst [vmem:[#allocation5 + $0x38] sm:$0xff] %v1246
      %1263 = vst [vmem:[#allocation5 + $0x40] sm:$0xff] %v1247
      %1264 = vst [vmem:[#allocation5 + $0x48] sm:$0xff] %v1248
      %1265 = vst [vmem:[#allocation5 + $0x50] sm:$0xff] %v1249
      %1266 = vst [vmem:[#allocation5 + $0x58] sm:$0xff] %v1250
      %1267 = vst [vmem:[#allocation5 + $0x60] sm:$0xff] %v1251
      %1268 = vst [vmem:[#allocation5 + $0x68] sm:$0xff] %v1252
      %1269 = vst [vmem:[#allocation5 + $0x70] sm:$0xff] %v1253
      %1270 = vst [vmem:[#allocation5 + $0x78] sm:$0xff] %v1254
    $region29: #{tpu_custom_call.1} parent=1 // pred_fallthru
      _
    // Predicated region
    $region30: #{tpu_custom_call.1} parent=1 // pred_check
      _
    $region31: #{tpu_custom_call.1} parent=1 // pred_check_branch
      %1272 = sbr.rel (0) target = $region33
    $region32: #{tpu_custom_call.1} parent=1 // pred_region
      %s1274 = ssub.s32 2048, 2048
      %1275 = vsyncadd [#allocation6], %s1274
      %s1276 = sshll.u32 [#allocation5], 4
      %s1277 = int_to_ptr.vmem [resolvable:$true] %s1276
      %1282 = dma.vmem_to_hbm [thread:$0]  %s1277, 2048, %s5, [#allocation6], 128, 128, 8
    $region33: #{tpu_custom_call.1} parent=1 // pred_fallthru
      _
    // Predicated region
    $region34: #{tpu_custom_call.1} parent=1 // pred_check
      _
    $region35: #{tpu_custom_call.1} parent=1 // pred_check_branch
      %1284 = sbr.rel (0) target = $region37
    $region36: #{tpu_custom_call.1} parent=1 // pred_region
      %1285 = dma.done [#allocation6], 2048
    $region37: #{tpu_custom_call.1} parent=1 // pred_fallthru
      _
    %1286 = vsyncpa [#allocation6], 1

</llo_original>
